<compile_context>
chip_gen: v7x
topology: tpu7x:2x2x1
jax: 0.10.0
libtpu: 0.0.40
codegen_flags: <defaults>
</compile_context>

<pallas_src>
import jax
import jax.numpy as jnp
from jax.experimental import pallas as pl
from jax.experimental.pallas import tpu as pltpu


def _round_up(n, m):
    return ((n + m - 1) // m) * m


def _mlp_kernel(x_ref, w1_ref, b1_ref, w2_ref, b2_ref, w3_ref, b3_ref, o_ref):
    # x tile: (TB, F) f32 straight from HBM.  Cast to bf16 here (VPU has
    # slack) rather than in the wrapper, which would add an HBM pass.
    xb = x_ref[...].astype(jnp.bfloat16)                      # (TB, F)

    # Layer 1 (MXU), "transposed network" form: contract the feature (minor)
    # dim of both operands so the batch lands on lanes -> lane-dense.
    h1 = jax.lax.dot_general(
        w1_ref[...], xb,                                      # (32,F) x (TB,F)
        dimension_numbers=(((1,), (1,)), ((), ())),
        preferred_element_type=jnp.float32)                   # (32, TB)
    h1 = jnp.maximum(h1 + b1_ref[...], 0.0)                   # b1: (32, 1)

    # Layer 2: tiny bf16 matmul (32 -> 8); batch stays on lanes.
    h2 = jnp.dot(w2_ref[...], h1.astype(jnp.bfloat16),        # (8,32) x (32,TB)
                 preferred_element_type=jnp.float32)          # (8, TB)
    h2 = jnp.maximum(h2 + b2_ref[...], 0.0)                   # b2: (8, 1)

    # Layer 3: (8 -> 1) as VPU broadcast-multiply + sublane reduction (XLU);
    # an N=1 MXU pass would be wasted.  Output is already lane-dense (1, TB).
    out = jnp.sum(h2 * w3_ref[...], axis=0, keepdims=True) + b3_ref[...]

    o_ref[...] = out.astype(o_ref.dtype)                      # (1, TB)


def regression_model_forward(x, params, max_tile_batch=16384):
    """x: (B, input_size) float32.  params: dict with w1,b1,w2,b2,w3,b3."""
    x = x.astype(jnp.float32)
    B, F = x.shape

    # ---- batch tile selection --------------------------------------------
    # Target ~2 MiB of real HBM bytes per tile (amortize the ~0.35 us
    # per-grid-step overhead) while keeping the double-buffered, lane-padded
    # f32 x block under ~16 MiB of VMEM (fits v5e/v6e/v7x scoped budgets).
    lane_padded_row_bytes = _round_up(max(F, 1), 128) * 4
    tb_vmem_cap = (16 * 1024 * 1024) // (2 * lane_padded_row_bytes)
    tb_hbm_target = (2 * 1024 * 1024) // (F * 4)
    TB = min(max(4096, tb_hbm_target), tb_vmem_cap, max_tile_batch)
    TB = max(512, (TB // 512) * 512)

    if B <= TB:
        # Single tile: shrink to the batch (rounded up so sublane layouts of
        # the in-kernel bf16 tile stay unmasked).  This tiny pad is cheap.
        TB = _round_up(B, 16)
        if TB != B:
            x = jnp.pad(x, ((0, TB - B), (0, 0)))
        num_tiles = 1
    else:
        # Ragged tail handled by Pallas edge blocks: no padded copy of x.
        # Garbage rows of the last tile only hit output lanes >= B (sliced).
        num_tiles = pl.cdiv(B, TB)

    # Weights/biases are VMEM-resident (constant index_map); bf16 only for
    # the matmul operands, biases and the last layer stay f32.
    w1 = params["w1"].astype(jnp.bfloat16)   # (32, F)   = fc1.weight
    b1 = params["b1"].astype(jnp.float32)    # (32, 1)   = fc1.bias[:, None]
    w2 = params["w2"].astype(jnp.bfloat16)   # (8, 32)   = fc2.weight
    b2 = params["b2"].astype(jnp.float32)    # (8, 1)    = fc2.bias[:, None]
    w3 = params["w3"].astype(jnp.float32)    # (8, 1)    = fc3.weight.T
    b3 = params["b3"].astype(jnp.float32)    # (1, 1)    = fc3.bias[:, None]

    resident = lambda a: pl.BlockSpec(a.shape, lambda i: (0, 0))

    cost = pl.CostEstimate(
        flops=2 * num_tiles * TB * (F * 32 + 32 * 8 + 8),
        transcendentals=0,
        bytes_accessed=(B * F * 4                     # x (f32, read in-kernel)
                        + num_tiles * TB * 4          # lane-dense output slab
                        + 32 * F * 2                  # w1 (bf16)
                        + (32 + 8 * 32 + 8 + 8 + 1) * 4),
    )

    out = pl.pallas_call(
        _mlp_kernel,
        out_shape=jax.ShapeDtypeStruct((num_tiles, 1, TB), jnp.float32),
        grid=(num_tiles,),
        in_specs=[
            pl.BlockSpec((TB, F), lambda i: (i, 0)),          # x: batch-tiled
            resident(w1), resident(b1),
            resident(w2), resident(b2),
            resident(w3), resident(b3),
        ],
        # Leading tile dim squeezed; kernel writes a lane-dense (1, TB) block.
        out_specs=pl.BlockSpec((None, 1, TB), lambda i: (i, 0, 0)),
        compiler_params=pltpu.CompilerParams(
            dimension_semantics=("parallel",),   # shard batch tiles across TCs
            vmem_limit_bytes=48 * 1024 * 1024,   # <= v7x 64 MiB; ample elsewhere
        ),
        cost_estimate=cost,
    )(x, w1, b1, w2, b2, w3, b3)

    return out.reshape(-1)[:B].reshape(B, 1)


def init_params(key, input_size):
    """Deterministic init in the layouts the kernel consumes.
    Mapping from the PyTorch module's state_dict:
      w1 = fc1.weight (32, input_size)   b1 = fc1.bias.reshape(32, 1)
      w2 = fc2.weight (8, 32)            b2 = fc2.bias.reshape(8, 1)
      w3 = fc3.weight.T (8, 1)           b3 = fc3.bias.reshape(1, 1)
    """
    k1, k2, k3, k4, k5, k6 = jax.random.split(key, 6)

    def unif(k, shape, fan_in):
        bound = 1.0 / jnp.sqrt(fan_in)
        return jax.random.uniform(k, shape, jnp.float32, -bound, bound)

    return {
        "w1": unif(k1, (32, input_size), input_size),
        "b1": unif(k2, (32, 1), input_size),
        "w2": unif(k3, (8, 32), 32),
        "b2": unif(k4, (8, 1), 32),
        "w3": unif(k5, (8, 1), 8),
        "b3": unif(k6, (1, 1), 8),
    }


def _reference_forward_f32(x, p):
    h1 = jnp.maximum(x @ p["w1"].T + p["b1"].T, 0.0)
    h2 = jnp.maximum(h1 @ p["w2"].T + p["b2"].T, 0.0)
    return h2 @ p["w3"] + p["b3"]


def _reference_forward_matched(x, p):
    # Same dtype strategy as the kernel: bf16 matmul inputs, f32 accumulation,
    # f32 biases / ReLU / last layer.
    xb = x.astype(jnp.bfloat16)
    h1 = jnp.dot(xb, p["w1"].astype(jnp.bfloat16).T,
                 preferred_element_type=jnp.float32) + p["b1"].T
    h1 = jnp.maximum(h1, 0.0)
    h2 = jnp.dot(h1.astype(jnp.bfloat16), p["w2"].astype(jnp.bfloat16).T,
                 preferred_element_type=jnp.float32) + p["b2"].T
    h2 = jnp.maximum(h2, 0.0)
    return h2 @ p["w3"] + p["b3"]


if __name__ == "__main__":
    key = jax.random.PRNGKey(0)
    k_x, k_p, k_x2 = jax.random.split(key, 3)

    # Small case: batch deliberately not a multiple of 8 (single-tile path).
    batch, input_size = 10, 16
    x = jax.random.normal(k_x, (batch, input_size), jnp.float32)
    params = init_params(k_p, input_size)

    out = regression_model_forward(x, params)
    out = jax.block_until_ready(out)
    assert out.shape == (batch, 1)

    ref_matched = _reference_forward_matched(x, params)
    ref_f32 = _reference_forward_f32(x, params)
    assert jnp.allclose(out, ref_matched, atol=2e-2, rtol=2e-2), \
        float(jnp.max(jnp.abs(out - ref_matched)))
    # Semantics vs. the pure-f32 PyTorch module (only bf16 matmul rounding).
    assert jnp.allclose(out, ref_f32, atol=5e-2, rtol=5e-2), \
        float(jnp.max(jnp.abs(out - ref_f32)))

    # Multi-tile + ragged-tail path (edge blocks, no padded copy of x).
    batch2 = 1100
    x2 = jax.random.normal(k_x2, (batch2, input_size), jnp.float32)
    out2 = jax.block_until_ready(
        regression_model_forward(x2, params, max_tile_batch=512))
    assert out2.shape == (batch2, 1)
    ref2 = _reference_forward_matched(x2, params)
    assert jnp.allclose(out2, ref2, atol=2e-2, rtol=2e-2), \
        float(jnp.max(jnp.abs(out2 - ref2)))

    print("KERNEL_OK")
</pallas_src>

<mosaic_0001>
module attributes {stable_mosaic.version = 11 : i64} {
  func.func @_mlp_kernel(%arg0: i32, %arg1: memref<16x16xf32, #tpu.memory_space<vmem>>, %arg2: memref<32x16xbf16, #tpu.memory_space<vmem>>, %arg3: memref<32x1xf32, #tpu.memory_space<vmem>>, %arg4: memref<8x32xbf16, #tpu.memory_space<vmem>>, %arg5: memref<8x1xf32, #tpu.memory_space<vmem>>, %arg6: memref<8x1xf32, #tpu.memory_space<vmem>>, %arg7: memref<1x1xf32, #tpu.memory_space<vmem>>, %arg8: memref<1x1x16xf32, #tpu.memory_space<vmem>>) attributes {dimension_semantics = [#tpu.dimension_semantics<parallel>], iteration_bounds = array<i64: 1>, scalar_prefetch = 0 : i64, scratch_operands = 0 : i64, tpu.core_type = #tpu.core_type<tc>, window_params = [{transform_indices = @transform_0, window_bounds = array<i64: 16, 16>}, {pipeline_mode = #tpu.pipeline_mode<synchronous>, transform_indices = @transform_1, window_bounds = array<i64: 32, 16>}, {pipeline_mode = #tpu.pipeline_mode<synchronous>, transform_indices = @transform_2, window_bounds = array<i64: 32, 1>}, {pipeline_mode = #tpu.pipeline_mode<synchronous>, transform_indices = @transform_3, window_bounds = array<i64: 8, 32>}, {pipeline_mode = #tpu.pipeline_mode<synchronous>, transform_indices = @transform_4, window_bounds = array<i64: 8, 1>}, {pipeline_mode = #tpu.pipeline_mode<synchronous>, transform_indices = @transform_5, window_bounds = array<i64: 8, 1>}, {pipeline_mode = #tpu.pipeline_mode<synchronous>, transform_indices = @transform_6, window_bounds = array<i64: 1, 1>}, {transform_indices = @transform_7, window_bounds = array<i64: 1, 1, 16>}]} {
    %c0 = arith.constant 0 : index
    %c0_0 = arith.constant 0 : index
    %0 = vector.load %arg1[%c0, %c0_0] : memref<16x16xf32, #tpu.memory_space<vmem>>, vector<16x16xf32>
    %1 = arith.truncf %0 : vector<16x16xf32> to vector<16x16xbf16>
    %c0_1 = arith.constant 0 : index
    %c0_2 = arith.constant 0 : index
    %2 = vector.load %arg2[%c0_1, %c0_2] : memref<32x16xbf16, #tpu.memory_space<vmem>>, vector<32x16xbf16>
    %cst = arith.constant dense<0.000000e+00> : vector<32x16xf32>
    %3 = tpu.matmul %2, %1, %cst {dimension_numbers = #tpu.dot_dimension_numbers<[1], [1], [0], [0], [0, 0, 1, 0], [], []>} : vector<32x16xbf16>, vector<16x16xbf16>, vector<32x16xf32> -> vector<32x16xf32>
    %c0_3 = arith.constant 0 : index
    %c0_4 = arith.constant 0 : index
    %4 = vector.load %arg3[%c0_3, %c0_4] : memref<32x1xf32, #tpu.memory_space<vmem>>, vector<32x1xf32>
    %5 = vector.broadcast %4 : vector<32x1xf32> to vector<32x16xf32>
    %6 = arith.addf %3, %5 : vector<32x16xf32>
    %cst_5 = arith.constant 0.000000e+00 : f32
    %7 = vector.broadcast %cst_5 : f32 to vector<32x16xf32>
    %8 = arith.maximumf %6, %7 : vector<32x16xf32>
    %c0_6 = arith.constant 0 : index
    %c0_7 = arith.constant 0 : index
    %9 = vector.load %arg4[%c0_6, %c0_7] : memref<8x32xbf16, #tpu.memory_space<vmem>>, vector<8x32xbf16>
    %10 = arith.truncf %8 : vector<32x16xf32> to vector<32x16xbf16>
    %cst_8 = arith.constant dense<0.000000e+00> : vector<8x16xf32>
    %11 = tpu.matmul %9, %10, %cst_8 {dimension_numbers = #tpu.dot_dimension_numbers<[1], [0], [0], [1], [0, 0, 1, 1], [], []>} : vector<8x32xbf16>, vector<32x16xbf16>, vector<8x16xf32> -> vector<8x16xf32>
    %c0_9 = arith.constant 0 : index
    %c0_10 = arith.constant 0 : index
    %12 = vector.load %arg5[%c0_9, %c0_10] : memref<8x1xf32, #tpu.memory_space<vmem>>, vector<8x1xf32>
    %13 = vector.broadcast %12 : vector<8x1xf32> to vector<8x16xf32>
    %14 = arith.addf %11, %13 : vector<8x16xf32>
    %cst_11 = arith.constant 0.000000e+00 : f32
    %15 = vector.broadcast %cst_11 : f32 to vector<8x16xf32>
    %16 = arith.maximumf %14, %15 : vector<8x16xf32>
    %c0_12 = arith.constant 0 : index
    %c0_13 = arith.constant 0 : index
    %17 = vector.load %arg6[%c0_12, %c0_13] : memref<8x1xf32, #tpu.memory_space<vmem>>, vector<8x1xf32>
    %18 = vector.broadcast %17 : vector<8x1xf32> to vector<8x16xf32>
    %19 = arith.mulf %16, %18 : vector<8x16xf32>
    %cst_14 = arith.constant dense<0.000000e+00> : vector<16xf32>
    %20 = vector.multi_reduction <add>, %19, %cst_14 [0] : vector<8x16xf32> to vector<16xf32>
    %21 = vector.shape_cast %20 : vector<16xf32> to vector<1x16xf32>
    %c0_15 = arith.constant 0 : index
    %c0_16 = arith.constant 0 : index
    %22 = vector.load %arg7[%c0_15, %c0_16] : memref<1x1xf32, #tpu.memory_space<vmem>>, vector<1x1xf32>
    %23 = vector.broadcast %22 : vector<1x1xf32> to vector<1x16xf32>
    %24 = arith.addf %21, %23 : vector<1x16xf32>
    %c0_17 = arith.constant 0 : index
    %c0_18 = arith.constant 0 : index
    %c0_19 = arith.constant 0 : index
    %25 = vector.load %arg8[%c0_17, %c0_18, %c0_19] : memref<1x1x16xf32, #tpu.memory_space<vmem>>, vector<1x1x16xf32>
    %26 = vector.shape_cast %25 : vector<1x1x16xf32> to vector<1x16xf32>
    %27 = vector.shape_cast %24 : vector<1x16xf32> to vector<1x1x16xf32>
    tpu.vector_store %arg8[%c0_17, %c0_18, %c0_19], %27 {strides = array<i32>} : memref<1x1x16xf32, #tpu.memory_space<vmem>>, vector<1x1x16xf32>,
    return
  }
  func.func @transform_0(%arg0: i32) -> (i32, i32) {
    %c0_i32 = arith.constant 0 : i32
    %c0_i32_0 = arith.constant 0 : i32
    return %arg0, %c0_i32 : i32, i32
  }
  func.func @transform_1(%arg0: i32) -> (i32, i32) {
    %c0_i32 = arith.constant 0 : i32
    %c0_i32_0 = arith.constant 0 : i32
    %c0_i32_1 = arith.constant 0 : i32
    return %c0_i32, %c0_i32_0 : i32, i32
  }
  func.func @transform_2(%arg0: i32) -> (i32, i32) {
    %c0_i32 = arith.constant 0 : i32
    %c0_i32_0 = arith.constant 0 : i32
    %c0_i32_1 = arith.constant 0 : i32
    return %c0_i32, %c0_i32_0 : i32, i32
  }
  func.func @transform_3(%arg0: i32) -> (i32, i32) {
    %c0_i32 = arith.constant 0 : i32
    %c0_i32_0 = arith.constant 0 : i32
    %c0_i32_1 = arith.constant 0 : i32
    return %c0_i32, %c0_i32_0 : i32, i32
  }
  func.func @transform_4(%arg0: i32) -> (i32, i32) {
    %c0_i32 = arith.constant 0 : i32
    %c0_i32_0 = arith.constant 0 : i32
    %c0_i32_1 = arith.constant 0 : i32
    return %c0_i32, %c0_i32_0 : i32, i32
  }
  func.func @transform_5(%arg0: i32) -> (i32, i32) {
    %c0_i32 = arith.constant 0 : i32
    %c0_i32_0 = arith.constant 0 : i32
    %c0_i32_1 = arith.constant 0 : i32
    return %c0_i32, %c0_i32_0 : i32, i32
  }
  func.func @transform_6(%arg0: i32) -> (i32, i32) {
    %c0_i32 = arith.constant 0 : i32
    %c0_i32_0 = arith.constant 0 : i32
    %c0_i32_1 = arith.constant 0 : i32
    return %c0_i32, %c0_i32_0 : i32, i32
  }
  func.func @transform_7(%arg0: i32) -> (i32, i32, i32) {
    %c0_i32 = arith.constant 0 : i32
    %c0_i32_0 = arith.constant 0 : i32
    %c0_i32_1 = arith.constant 0 : i32
    return %arg0, %c0_i32, %c0_i32_0 : i32, i32, i32
  }
}

</mosaic_0001>

<llo_original>
// kernel: tpu_custom_call.1
$region0: #{tpu_custom_call.1}
  #allocation0 [shape = 'u32[]', space=smem, size = 0x4, offset = 0x4, fixed_abs, tag = 'smem constant byte address 0x4 - core index']
  #allocation1 [shape = 'u32[144,128]{1,0:T(1,128)}', space=vmem, size = 0x12000, scoped, tag = 'internal scratch']
  #allocation2 [shape = 'f32[1,1]{1,0:T(1,128)S(1)}', space=vmem, size = 0x200, scoped, tag = 'scoped memory for tpu_custom_call.1']
  %s0 = inlined_call_operand.vmem [shape: f32[16,16], index: 0, kind: input, shape index: {}]
  %s1 = inlined_call_operand.vmem [shape: bf16[32,16], index: 1, kind: input, shape index: {}]
  %s2 = inlined_call_operand.vmem [shape: f32[32,1], index: 2, kind: input, shape index: {}]
  %s3 = inlined_call_operand.vmem [shape: bf16[8,32], index: 3, kind: input, shape index: {}]
  %s4 = inlined_call_operand.vmem [shape: f32[8,1], index: 4, kind: input, shape index: {}]
  %s5 = inlined_call_operand.vmem [shape: f32[8,1], index: 5, kind: input, shape index: {}]
  %s6 = inlined_call_operand.<no memory space> [shape: f32[1,1], index: 6, kind: input, shape index: {}]
  %s7 = inlined_call_operand.hbm [shape: f32[1,1,16], index: 7, kind: output, shape index: {}]
  %s8 = sld [smem:[#allocation0]]
  $region38: #{tpu_custom_call.1} parent=0
    _
  %s10 = ssub.s32 1, %s8
  %s11 = scalar_select 0, %s10, %s8
  %v12 = vstv %s6
  %13 = vst [vmem:[#allocation2] sm:$0x1] %v12
  $region1: #{tpu_custom_call.1} parent=0
    #allocation3 [shape = 'u8[512]{0}', space=vmem, size = 0x400, scoped, tag = 'output window, operand 0, single buffered']
    #allocation4 [shape = 's32[1]{0}', space=sflag, size = 0x4, scoped, tag = 'scoped memory for tpu_custom_call.1']
    %14 = vsyncpa [#allocation4], 0
    // Predicated region
    $region2: #{tpu_custom_call.1} parent=1 // pred_check
      _
    $region3: #{tpu_custom_call.1} parent=1 // pred_check_branch
      %16 = sbr.rel (0) target = $region5
    $region4: #{tpu_custom_call.1} parent=1 // pred_region
      _
    $region5: #{tpu_custom_call.1} parent=1 // pred_fallthru
      _
    // Predicated region
    $region6: #{tpu_custom_call.1} parent=1 // pred_check
      _
    $region7: #{tpu_custom_call.1} parent=1 // pred_check_branch
      %18 = sbr.rel (0) target = $region9
    $region8: #{tpu_custom_call.1} parent=1 // pred_region
      _
    $region9: #{tpu_custom_call.1} parent=1 // pred_fallthru
      _
    // Predicated region
    $region10: #{tpu_custom_call.1} parent=1 // pred_check
      _
    $region11: #{tpu_custom_call.1} parent=1 // pred_check_branch
      %20 = sbr.rel (0) target = $region13
    $region12: #{tpu_custom_call.1} parent=1 // pred_region
      _
    $region13: #{tpu_custom_call.1} parent=1 // pred_fallthru
      _
    // Predicated region
    $region14: #{tpu_custom_call.1} parent=1 // pred_check
      _
    $region15: #{tpu_custom_call.1} parent=1 // pred_check_branch
      %22 = sbr.rel (0) target = $region17
    $region16: #{tpu_custom_call.1} parent=1 // pred_region
      _
    $region17: #{tpu_custom_call.1} parent=1 // pred_fallthru
      _
    // Predicated region
    $region18: #{tpu_custom_call.1} parent=1 // pred_check
      _
    $region19: #{tpu_custom_call.1} parent=1 // pred_check_branch
      %24 = sbr.rel (0) target = $region21
    $region20: #{tpu_custom_call.1} parent=1 // pred_region
      _
    $region21: #{tpu_custom_call.1} parent=1 // pred_fallthru
      _
    // Predicated region
    $region22: #{tpu_custom_call.1} parent=1 // pred_check
      _
    $region23: #{tpu_custom_call.1} parent=1 // pred_check_branch
      %26 = sbr.rel (0) target = $region25
    $region24: #{tpu_custom_call.1} parent=1 // pred_region
      _
    $region25: #{tpu_custom_call.1} parent=1 // pred_fallthru
      _
    // Predicated region
    $region26: #{tpu_custom_call.1} parent=1 // pred_check
      _
    $region27: #{tpu_custom_call.1} parent=1 // pred_check_branch
      %28 = sbr.rel (0) target = $region29
    $region28: #{tpu_custom_call.1} parent=1 // pred_region
      _
    $region29: #{tpu_custom_call.1} parent=1 // pred_fallthru
      _
    %v30 = vld [vmem:[%s0] sm:$0xff]
    %v31 = vld [vmem:[%s0 + $0x8] sm:$0xff]
    %v32 = vpack.c.bf16 %v31, %v30
    %v33 = vld [vmem:[%s1] sm:$0xf]
    %v34 = vld [vmem:[%s1 + $0x4] sm:$0xf]
    %v35 = vld [vmem:[%s1 + $0x8] sm:$0xf]
    %v36 = vld [vmem:[%s1 + $0xc] sm:$0xf]
    %v37 = vld [vmem:[%s2] sm:$0xff]
    %v38 = vld [vmem:[%s2 + $0x8] sm:$0xff]
    %v39 = vld [vmem:[%s2 + $0x10] sm:$0xff]
    %v40 = vld [vmem:[%s2 + $0x18] sm:$0xff]
    %42 = vset.pattern.permute.xlu0 0
    %43 = vperm.xlu0 %42, %v37
    %v44 = vpop.permute.xlu0 %43
    %47 = vset.pattern.permute.xlu0 0
    %48 = vperm.xlu0 %47, %v38
    %v49 = vpop.permute.xlu0 %48
    %52 = vset.pattern.permute.xlu0 0
    %53 = vperm.xlu0 %52, %v39
    %v54 = vpop.permute.xlu0 %53
    %57 = vset.pattern.permute.xlu0 0
    %58 = vperm.xlu0 %57, %v40
    %v59 = vpop.permute.xlu0 %58
    %v65 = vunpack.c.l.b16 %v33
    %v66 = vunpack.c.l.b16 %v34
    %v67 = vunpack.c.l.b16 %v35
    %v68 = vunpack.c.l.b16 %v36
    %v69 = vpack.c.b16 %v66, %v65
    %v70 = vpack.c.b16 %v68, %v67
    %vm71 = vcmask 130048
    %v73 = vsel %vm71, %v69, 0
    %v76 = vsel %vm71, %v70, 0
    %v79 = vsel %vm71, %v32, 0
    %81 = vmatprep.subr.bf16.mxu0 0
    %82 = vmatpush1.bf16.xpose.msra.mxu0 %v79
    %83 = vmatprep.subr.bf16.mxu0 0
    %84 = vmatpush1.bf16.xpose.msra.mxu0 0
    %85 = vmatprep.subr.bf16.mxu0 0
    %86 = vmatpush1.bf16.xpose.msra.mxu0 0
    %87 = vmatprep.subr.bf16.mxu0 0
    %88 = vmatpush1.bf16.xpose.msra.mxu0 0
    %89 = vmatprep.subr.bf16.mxu0 0
    %90 = vmatpush1.bf16.xpose.msra.mxu0 0
    %91 = vmatprep.subr.bf16.mxu0 0
    %92 = vmatpush1.bf16.xpose.msra.mxu0 0
    %93 = vmatprep.subr.bf16.mxu0 0
    %94 = vmatpush1.bf16.xpose.msra.mxu0 0
    %95 = vmatprep.subr.bf16.mxu0 0
    %96 = vmatpush1.bf16.xpose.msra.mxu0 0
    %97 = vmatprep.subr.bf16.mxu0 0
    %98 = vmatpush1.bf16.xpose.msra.mxu0 0
    %99 = vmatprep.subr.bf16.mxu0 0
    %100 = vmatpush1.bf16.xpose.msra.mxu0 0
    %101 = vmatprep.subr.bf16.mxu0 0
    %102 = vmatpush1.bf16.xpose.msra.mxu0 0
    %103 = vmatprep.subr.bf16.mxu0 0
    %104 = vmatpush1.bf16.xpose.msra.mxu0 0
    %105 = vmatprep.subr.bf16.mxu0 0
    %106 = vmatpush1.bf16.xpose.msra.mxu0 0
    %107 = vmatprep.subr.bf16.mxu0 0
    %108 = vmatpush1.bf16.xpose.msra.mxu0 0
    %109 = vmatprep.subr.bf16.mxu0 0
    %110 = vmatpush1.bf16.xpose.msra.mxu0 0
    %111 = vmatprep.subr.bf16.mxu0 0
    %112 = vmatpush1.bf16.xpose.msra.mxu0 0
    %113 = vmatprep.mubr.bf16.mxu0 0
    %114 = vmatmul.mubr.bf16.gmra.mrb[0].mxu0 %v73
    %v115 = vpop.f32.mrb[0].mxu0
    %v116 = vadd.f32 %v44, %v115
    %v117 = vpop.f32.mrb[0].mxu0
    %v118 = vpop.f32.mrb[0].mxu0
    %v119 = vadd.f32 %v49, %v118
    %v120 = vpop.f32.mrb[0].mxu0
    %121 = vmatprep.mubr.bf16.mxu0 0
    %122 = vmatmul.mubr.bf16.gmra.mrb[0].mxu0 %v76
    %v123 = vpop.f32.mrb[0].mxu0
    %v124 = vadd.f32 %v54, %v123
    %v125 = vpop.f32.mrb[0].mxu0
    %v126 = vpop.f32.mrb[0].mxu0
    %v127 = vadd.f32 %v59, %v126
    %v128 = vpop.f32.mrb[0].mxu0
    %129 = vdwg.mxu0
    %v130 = vmax.f32 %v116, 0.0
    %v131 = vmax.f32 %v119, 0.0
    %v132 = vmax.f32 %v124, 0.0
    %v133 = vmax.f32 %v127, 0.0
    %v134 = vld [vmem:[%s3] sm:$0xf]
    %v135 = vpack.c.bf16 %v131, %v130
    %v136 = vpack.c.bf16 %v133, %v132
    %v137 = vld [vmem:[%s4] sm:$0xff]
    %139 = vset.pattern.permute.xlu0 0
    %140 = vperm.xlu0 %139, %v137
    %v141 = vpop.permute.xlu0 %140
    %vm143 = vcmask 261120
    %v145 = vsel %vm143, %v134, 0
    %147 = vmatprep.subr.bf16.mxu0 0
    %148 = vmatpush1.bf16.msra.mxu0 %v135
    %149 = vmatprep.subr.bf16.mxu0 0
    %150 = vmatpush1.bf16.msra.mxu0 %v136
    %151 = vmatprep.subr.bf16.mxu0 0
    %152 = vmatpush1.bf16.msra.mxu0 0
    %153 = vmatprep.subr.bf16.mxu0 0
    %154 = vmatpush1.bf16.msra.mxu0 0
    %155 = vmatprep.subr.bf16.mxu0 0
    %156 = vmatpush1.bf16.msra.mxu0 0
    %157 = vmatprep.subr.bf16.mxu0 0
    %158 = vmatpush1.bf16.msra.mxu0 0
    %159 = vmatprep.subr.bf16.mxu0 0
    %160 = vmatpush1.bf16.msra.mxu0 0
    %161 = vmatprep.subr.bf16.mxu0 0
    %162 = vmatpush1.bf16.msra.mxu0 0
    %163 = vmatprep.subr.bf16.mxu0 0
    %164 = vmatpush1.bf16.msra.mxu0 0
    %165 = vmatprep.subr.bf16.mxu0 0
    %166 = vmatpush1.bf16.msra.mxu0 0
    %167 = vmatprep.subr.bf16.mxu0 0
    %168 = vmatpush1.bf16.msra.mxu0 0
    %169 = vmatprep.subr.bf16.mxu0 0
    %170 = vmatpush1.bf16.msra.mxu0 0
    %171 = vmatprep.subr.bf16.mxu0 0
    %172 = vmatpush1.bf16.msra.mxu0 0
    %173 = vmatprep.subr.bf16.mxu0 0
    %174 = vmatpush1.bf16.msra.mxu0 0
    %175 = vmatprep.subr.bf16.mxu0 0
    %176 = vmatpush1.bf16.msra.mxu0 0
    %177 = vmatprep.subr.bf16.mxu0 0
    %178 = vmatpush1.bf16.msra.mxu0 0
    %179 = vmatprep.mubr.bf16.mxu0 0
    %180 = vmatmul.mubr.bf16.gmra.mrb[0].mxu0 %v145
    %v181 = vpop.f32.mrb[0].mxu0
    %v182 = vadd.f32 %v141, %v181
    %v183 = vpop.f32.mrb[0].mxu0
    %v184 = vpop.f32.mrb[0].mxu0
    %v185 = vpop.f32.mrb[0].mxu0
    %186 = vdwg.mxu0
    %v187 = vmax.f32 %v182, 0.0
    %v188 = vld [vmem:[%s5] sm:$0xff]
    %190 = vset.pattern.permute.xlu0 0
    %191 = vperm.xlu0 %190, %v188
    %v192 = vpop.permute.xlu0 %191
    %v194 = vmul.f32 %v187, %v192
    %v195 = vsel %vm71, %v194, 0.0
    %v196 = vrot.slane %v195, 4
    %v197 = vadd.f32 %v195, %v196
    %v198 = vrot.slane %v197, 2
    %v199 = vadd.f32 %v197, %v198
    %v200 = vrot.slane %v199, 1
    %v201 = vadd.f32 %v199, %v200
    %v202 = vld [vmem:[#allocation2] sm:$0x1]
    %204 = vset.pattern.permute.xlu0 0
    %205 = vperm.xlu0 %204, %v202
    %v206 = vpop.permute.xlu0 %205
    %v208 = vlaneseq
    %v209 = vshrl.u32 %v208, 7
    %v210 = vsub.s32 0, %v209
    %v211 = vrot.slane %v206, %v210
    %v212 = vadd.f32 %v201, %v211
    %vm213 = vcmask 122880
    %214 = vst.msk [vmem:[#allocation3] sm:$0x1] %vm213, %v212
    // Predicated region
    $region30: #{tpu_custom_call.1} parent=1 // pred_check
      _
    $region31: #{tpu_custom_call.1} parent=1 // pred_check_branch
      %216 = sbr.rel (0) target = $region33
    $region32: #{tpu_custom_call.1} parent=1 // pred_region
      %s218 = ssub.s32 16, 16
      %219 = vsyncadd [#allocation4], %s218
      %s221 = sshll.u32 [#allocation3], 4
      %s222 = int_to_ptr.vmem [resolvable:$true] %s221
      %224 = dma.vmem_to_hbm [thread:$0]  %s222, 16, %s7, [#allocation4]
    $region33: #{tpu_custom_call.1} parent=1 // pred_fallthru
      _
    // Predicated region
    $region34: #{tpu_custom_call.1} parent=1 // pred_check
      _
    $region35: #{tpu_custom_call.1} parent=1 // pred_check_branch
      %226 = sbr.rel (0) target = $region37
    $region36: #{tpu_custom_call.1} parent=1 // pred_region
      %227 = dma.done [#allocation4], 16
    $region37: #{tpu_custom_call.1} parent=1 // pred_fallthru
      _
    %228 = vsyncpa [#allocation4], 1

</llo_original>
